<compile_context>
chip_gen: v7x
topology: tpu7x:2x2x1
jax: 0.10.0
libtpu: 0.0.40
codegen_flags: <defaults>
</compile_context>

<pallas_src>
import functools

import jax
import jax.numpy as jnp
import numpy as np
from jax.experimental import pallas as pl
from jax.experimental.pallas import tpu as pltpu

_LANES = 128      # batch lives on the lane axis
_SUBLANES = 8     # action rows padded to a sublane multiple for dense tiles


def _round_up(v, m):
    return (v + m - 1) // m * m


def _mac_matmul(w, x):
    """(out, K) @ (K, TB) as K unrolled VPU broadcast multiply-adds.

    K, N are 4..10 for this net, so the MXU would be <4% utilized; exact
    f32 VPU math also sidesteps matmul-precision differences vs. reference.
    """
    acc = w[:, 0:1] * x[0:1, :]
    for k in range(1, w.shape[1]):
        acc = acc + w[:, k:k + 1] * x[k:k + 1, :]
    return acc


def net_kernel(x_ref, w1_ref, b1_ref, w2_ref, b2_ref, w3_ref, b3_ref, o_ref):
    """One batch tile.  Batch on LANES, features on sublanes.

      x_ref  : (n_states, TB)
      w*_ref : PyTorch-native [out, in];  b*_ref : (out, 1)
      w3/b3  : sublane-padded to A_PAD rows (zero weights, -1e30 bias)
      o_ref  : (A_PAD, TB) log-probs; rows [:n_actions] are valid
    """
    x = x_ref[...]
    h1 = jnp.tanh(_mac_matmul(w1_ref[...], x) + b1_ref[...])
    h2 = jnp.tanh(_mac_matmul(w2_ref[...], h1) + b2_ref[...])
    logits = _mac_matmul(w3_ref[...], h2) + b3_ref[...]
    # log_softmax over the action (sublane) axis; padded rows carry a -1e30
    # bias so they never win the max and underflow to 0 in the sum (f32-safe).
    m = jnp.max(logits, axis=0, keepdims=True)
    z = logits - m
    lse = jnp.log(jnp.sum(jnp.exp(z), axis=0, keepdims=True))
    o_ref[...] = (z - lse).astype(o_ref.dtype)


@functools.partial(jax.jit, static_argnames=("block_cols",))
def net_forward_pallas(x, kp, *, block_cols=2048):
    """x: (B, n_states) f32 -> (A_PAD, B) log-probs (rows [:n_actions] valid)."""
    B, n_states = x.shape
    hidden = kp["w1"].shape[0]
    a_pad = kp["w3p"].shape[0]

    x_t = x.T  # (n_states, B): batch -> lanes (tiny B*16B layout change)

    if B <= _LANES:
        tb = B                                   # single full-width block
    else:
        # lane-aligned tile; >= 2 grid steps so both v7x TCs get work,
        # capped so huge rollouts amortize the ~0.35us/step pipeline cost.
        tb = min(block_cols, max(_LANES, _round_up(pl.cdiv(B, 2), _LANES)))
    grid = (pl.cdiv(B, tb),)

    const = lambda i: (0, 0)                     # weights resident across steps
    return pl.pallas_call(
        net_kernel,
        out_shape=jax.ShapeDtypeStruct((a_pad, B), jnp.float32),
        grid=grid,
        in_specs=[
            pl.BlockSpec((n_states, tb), lambda i: (0, i)),   # x tile
            pl.BlockSpec((hidden, n_states), const),          # w1
            pl.BlockSpec((hidden, 1), const),                 # b1
            pl.BlockSpec((hidden, hidden), const),            # w2
            pl.BlockSpec((hidden, 1), const),                 # b2
            pl.BlockSpec((a_pad, hidden), const),             # w3 (row-padded)
            pl.BlockSpec((a_pad, 1), const),                  # b3 (row-padded)
        ],
        out_specs=pl.BlockSpec((a_pad, tb), lambda i: (0, i)),
        compiler_params=pltpu.CompilerParams(
            dimension_semantics=("parallel",)),
    )(x_t, kp["w1"], kp["b1"], kp["w2"], kp["b2"], kp["w3p"], kp["b3p"])


@functools.partial(jax.jit, static_argnames=("n_actions",))
def _xla_forward(x, kp, n_actions):
    """Fused-XLA fallback for tiny per-env-step batches."""
    hi = jax.lax.Precision.HIGHEST
    h1 = jnp.tanh(jnp.dot(x, kp["w1"].T, precision=hi) + kp["b1"][:, 0])
    h2 = jnp.tanh(jnp.dot(h1, kp["w2"].T, precision=hi) + kp["b2"][:, 0])
    logits = (jnp.dot(h2, kp["w3p"][:n_actions].T, precision=hi)
              + kp["b3p"][:n_actions, 0])
    return jax.nn.log_softmax(logits, axis=-1)


def net_forward(x, kp, n_actions, *, min_pallas_batch=33, block_cols=2048):
    """Module-equivalent forward: (B, n_states) -> (B, n_actions) log-probs."""
    B = x.shape[0]
    if B < min_pallas_batch:
        return _xla_forward(x, kp, n_actions)
    out_pad = net_forward_pallas(x, kp, block_cols=block_cols)
    # Consumer-side view of the padded slab (or fuse the gather downstream).
    return out_pad[:n_actions, :].T


def init_params(key, n_states, n_actions, hidden_size=10):
    """Matches the PyTorch init: W ~ N(0, 0.1) in [out, in] layout, bias = 0.1
    stored as (out, 1) columns for in-kernel lane broadcast."""
    k1, k2, k3 = jax.random.split(key, 3)
    return {
        "w1": 0.1 * jax.random.normal(k1, (hidden_size, n_states), jnp.float32),
        "b1": jnp.full((hidden_size, 1), 0.1, jnp.float32),
        "w2": 0.1 * jax.random.normal(k2, (hidden_size, hidden_size), jnp.float32),
        "b2": jnp.full((hidden_size, 1), 0.1, jnp.float32),
        "w3": 0.1 * jax.random.normal(k3, (n_actions, hidden_size), jnp.float32),
        "b3": jnp.full((n_actions, 1), 0.1, jnp.float32),
    }


def prepare_kernel_params(params):
    """HOISTED out of the per-call path: pad the output layer once (at init /
    param update) so the jitted forward does no padding work."""
    n_actions, hidden = params["w3"].shape
    a_pad = max(_SUBLANES, _round_up(n_actions, _SUBLANES))
    w3p = jnp.zeros((a_pad, hidden), jnp.float32).at[:n_actions].set(
        params["w3"].astype(jnp.float32))
    b3p = jnp.full((a_pad, 1), -1e30, jnp.float32).at[:n_actions].set(
        params["b3"].astype(jnp.float32))
    return {
        "w1": params["w1"], "b1": params["b1"],
        "w2": params["w2"], "b2": params["b2"],
        "w3p": w3p, "b3p": b3p,
    }


def reference_forward(x, p):
    """Independent float64 numpy reference of the PyTorch forward pass."""
    x = np.asarray(x, np.float64)
    w1, b1 = np.asarray(p["w1"], np.float64), np.asarray(p["b1"], np.float64)[:, 0]
    w2, b2 = np.asarray(p["w2"], np.float64), np.asarray(p["b2"], np.float64)[:, 0]
    w3, b3 = np.asarray(p["w3"], np.float64), np.asarray(p["b3"], np.float64)[:, 0]
    h1 = np.tanh(x @ w1.T + b1)
    h2 = np.tanh(h1 @ w2.T + b2)
    logits = h2 @ w3.T + b3
    logits = logits - logits.max(axis=-1, keepdims=True)
    return logits - np.log(np.exp(logits).sum(axis=-1, keepdims=True))


if __name__ == "__main__":
    n_states, n_actions, hidden = 4, 2, 10
    kp_key, kd_key = jax.random.split(jax.random.PRNGKey(0))

    params = init_params(kp_key, n_states, n_actions, hidden)
    kparams = prepare_kernel_params(params)   # done once, NOT per call

    data_keys = jax.random.split(kd_key, 4)
    cases = (("small", 8), ("ragged", 300), ("rollout", 1024))
    for kx, (name, B) in zip(data_keys[:3], cases):
        x = jax.random.normal(kx, (B, n_states), jnp.float32)
        out_pad = jax.block_until_ready(net_forward_pallas(x, kparams))
        assert out_pad.shape == (kparams["w3p"].shape[0], B)
        out = np.asarray(out_pad)[:n_actions, :].T          # (B, n_actions) view
        ref = reference_forward(x, params)
        assert np.allclose(out, ref, atol=1e-4, rtol=1e-4), \
            f"mismatch vs reference ({name}, B={B})"

    # Tiny per-env-step batch takes the fused-XLA fallback path.
    x_tiny = jax.random.normal(data_keys[3], (4, n_states), jnp.float32)
    out_tiny = np.asarray(jax.block_until_ready(
        net_forward(x_tiny, kparams, n_actions)))
    assert np.allclose(out_tiny, reference_forward(x_tiny, params),
                       atol=1e-4, rtol=1e-4), "mismatch vs reference (fallback)"

    print("KERNEL_OK")
</pallas_src>

<mosaic_0001>
module attributes {stable_mosaic.version = 11 : i64} {
  func.func @net_kernel(%arg0: i32, %arg1: memref<4x8xf32, #tpu.memory_space<vmem>>, %arg2: memref<10x4xf32, #tpu.memory_space<vmem>>, %arg3: memref<10x1xf32, #tpu.memory_space<vmem>>, %arg4: memref<10x10xf32, #tpu.memory_space<vmem>>, %arg5: memref<10x1xf32, #tpu.memory_space<vmem>>, %arg6: memref<8x10xf32, #tpu.memory_space<vmem>>, %arg7: memref<8x1xf32, #tpu.memory_space<vmem>>, %arg8: memref<8x8xf32, #tpu.memory_space<vmem>>) attributes {dimension_semantics = [#tpu.dimension_semantics<parallel>], iteration_bounds = array<i64: 1>, scalar_prefetch = 0 : i64, scratch_operands = 0 : i64, tpu.core_type = #tpu.core_type<tc>, window_params = [{transform_indices = @transform_0, window_bounds = array<i64: 4, 8>}, {pipeline_mode = #tpu.pipeline_mode<synchronous>, transform_indices = @transform_1, window_bounds = array<i64: 10, 4>}, {pipeline_mode = #tpu.pipeline_mode<synchronous>, transform_indices = @transform_2, window_bounds = array<i64: 10, 1>}, {pipeline_mode = #tpu.pipeline_mode<synchronous>, transform_indices = @transform_3, window_bounds = array<i64: 10, 10>}, {pipeline_mode = #tpu.pipeline_mode<synchronous>, transform_indices = @transform_4, window_bounds = array<i64: 10, 1>}, {pipeline_mode = #tpu.pipeline_mode<synchronous>, transform_indices = @transform_5, window_bounds = array<i64: 8, 10>}, {pipeline_mode = #tpu.pipeline_mode<synchronous>, transform_indices = @transform_6, window_bounds = array<i64: 8, 1>}, {transform_indices = @transform_7, window_bounds = array<i64: 8, 8>}]} {
    %c0 = arith.constant 0 : index
    %c0_0 = arith.constant 0 : index
    %0 = vector.load %arg1[%c0, %c0_0] : memref<4x8xf32, #tpu.memory_space<vmem>>, vector<4x8xf32>
    %c0_1 = arith.constant 0 : index
    %c0_2 = arith.constant 0 : index
    %1 = vector.load %arg2[%c0_1, %c0_2] : memref<10x4xf32, #tpu.memory_space<vmem>>, vector<10x4xf32>
    %2 = vector.extract_strided_slice %1 {offsets = [0, 0], sizes = [10, 1], strides = [1, 1]} : vector<10x4xf32> to vector<10x1xf32>
    %3 = vector.extract_strided_slice %0 {offsets = [0, 0], sizes = [1, 8], strides = [1, 1]} : vector<4x8xf32> to vector<1x8xf32>
    %4 = vector.broadcast %2 : vector<10x1xf32> to vector<10x8xf32>
    %5 = vector.broadcast %3 : vector<1x8xf32> to vector<10x8xf32>
    %6 = arith.mulf %4, %5 : vector<10x8xf32>
    %7 = vector.extract_strided_slice %1 {offsets = [0, 1], sizes = [10, 1], strides = [1, 1]} : vector<10x4xf32> to vector<10x1xf32>
    %8 = vector.extract_strided_slice %0 {offsets = [1, 0], sizes = [1, 8], strides = [1, 1]} : vector<4x8xf32> to vector<1x8xf32>
    %9 = vector.broadcast %7 : vector<10x1xf32> to vector<10x8xf32>
    %10 = vector.broadcast %8 : vector<1x8xf32> to vector<10x8xf32>
    %11 = arith.mulf %9, %10 : vector<10x8xf32>
    %12 = arith.addf %6, %11 : vector<10x8xf32>
    %13 = vector.extract_strided_slice %1 {offsets = [0, 2], sizes = [10, 1], strides = [1, 1]} : vector<10x4xf32> to vector<10x1xf32>
    %14 = vector.extract_strided_slice %0 {offsets = [2, 0], sizes = [1, 8], strides = [1, 1]} : vector<4x8xf32> to vector<1x8xf32>
    %15 = vector.broadcast %13 : vector<10x1xf32> to vector<10x8xf32>
    %16 = vector.broadcast %14 : vector<1x8xf32> to vector<10x8xf32>
    %17 = arith.mulf %15, %16 : vector<10x8xf32>
    %18 = arith.addf %12, %17 : vector<10x8xf32>
    %19 = vector.extract_strided_slice %1 {offsets = [0, 3], sizes = [10, 1], strides = [1, 1]} : vector<10x4xf32> to vector<10x1xf32>
    %20 = vector.extract_strided_slice %0 {offsets = [3, 0], sizes = [1, 8], strides = [1, 1]} : vector<4x8xf32> to vector<1x8xf32>
    %21 = vector.broadcast %19 : vector<10x1xf32> to vector<10x8xf32>
    %22 = vector.broadcast %20 : vector<1x8xf32> to vector<10x8xf32>
    %23 = arith.mulf %21, %22 : vector<10x8xf32>
    %24 = arith.addf %18, %23 : vector<10x8xf32>
    %c0_3 = arith.constant 0 : index
    %c0_4 = arith.constant 0 : index
    %25 = vector.load %arg3[%c0_3, %c0_4] : memref<10x1xf32, #tpu.memory_space<vmem>>, vector<10x1xf32>
    %26 = vector.broadcast %25 : vector<10x1xf32> to vector<10x8xf32>
    %27 = arith.addf %24, %26 : vector<10x8xf32>
    %28 = math.tanh %27 : vector<10x8xf32>
    %c0_5 = arith.constant 0 : index
    %c0_6 = arith.constant 0 : index
    %29 = vector.load %arg4[%c0_5, %c0_6] : memref<10x10xf32, #tpu.memory_space<vmem>>, vector<10x10xf32>
    %30 = vector.extract_strided_slice %29 {offsets = [0, 0], sizes = [10, 1], strides = [1, 1]} : vector<10x10xf32> to vector<10x1xf32>
    %31 = vector.extract_strided_slice %28 {offsets = [0, 0], sizes = [1, 8], strides = [1, 1]} : vector<10x8xf32> to vector<1x8xf32>
    %32 = vector.broadcast %30 : vector<10x1xf32> to vector<10x8xf32>
    %33 = vector.broadcast %31 : vector<1x8xf32> to vector<10x8xf32>
    %34 = arith.mulf %32, %33 : vector<10x8xf32>
    %35 = vector.extract_strided_slice %29 {offsets = [0, 1], sizes = [10, 1], strides = [1, 1]} : vector<10x10xf32> to vector<10x1xf32>
    %36 = vector.extract_strided_slice %28 {offsets = [1, 0], sizes = [1, 8], strides = [1, 1]} : vector<10x8xf32> to vector<1x8xf32>
    %37 = vector.broadcast %35 : vector<10x1xf32> to vector<10x8xf32>
    %38 = vector.broadcast %36 : vector<1x8xf32> to vector<10x8xf32>
    %39 = arith.mulf %37, %38 : vector<10x8xf32>
    %40 = arith.addf %34, %39 : vector<10x8xf32>
    %41 = vector.extract_strided_slice %29 {offsets = [0, 2], sizes = [10, 1], strides = [1, 1]} : vector<10x10xf32> to vector<10x1xf32>
    %42 = vector.extract_strided_slice %28 {offsets = [2, 0], sizes = [1, 8], strides = [1, 1]} : vector<10x8xf32> to vector<1x8xf32>
    %43 = vector.broadcast %41 : vector<10x1xf32> to vector<10x8xf32>
    %44 = vector.broadcast %42 : vector<1x8xf32> to vector<10x8xf32>
    %45 = arith.mulf %43, %44 : vector<10x8xf32>
    %46 = arith.addf %40, %45 : vector<10x8xf32>
    %47 = vector.extract_strided_slice %29 {offsets = [0, 3], sizes = [10, 1], strides = [1, 1]} : vector<10x10xf32> to vector<10x1xf32>
    %48 = vector.extract_strided_slice %28 {offsets = [3, 0], sizes = [1, 8], strides = [1, 1]} : vector<10x8xf32> to vector<1x8xf32>
    %49 = vector.broadcast %47 : vector<10x1xf32> to vector<10x8xf32>
    %50 = vector.broadcast %48 : vector<1x8xf32> to vector<10x8xf32>
    %51 = arith.mulf %49, %50 : vector<10x8xf32>
    %52 = arith.addf %46, %51 : vector<10x8xf32>
    %53 = vector.extract_strided_slice %29 {offsets = [0, 4], sizes = [10, 1], strides = [1, 1]} : vector<10x10xf32> to vector<10x1xf32>
    %54 = vector.extract_strided_slice %28 {offsets = [4, 0], sizes = [1, 8], strides = [1, 1]} : vector<10x8xf32> to vector<1x8xf32>
    %55 = vector.broadcast %53 : vector<10x1xf32> to vector<10x8xf32>
    %56 = vector.broadcast %54 : vector<1x8xf32> to vector<10x8xf32>
    %57 = arith.mulf %55, %56 : vector<10x8xf32>
    %58 = arith.addf %52, %57 : vector<10x8xf32>
    %59 = vector.extract_strided_slice %29 {offsets = [0, 5], sizes = [10, 1], strides = [1, 1]} : vector<10x10xf32> to vector<10x1xf32>
    %60 = vector.extract_strided_slice %28 {offsets = [5, 0], sizes = [1, 8], strides = [1, 1]} : vector<10x8xf32> to vector<1x8xf32>
    %61 = vector.broadcast %59 : vector<10x1xf32> to vector<10x8xf32>
    %62 = vector.broadcast %60 : vector<1x8xf32> to vector<10x8xf32>
    %63 = arith.mulf %61, %62 : vector<10x8xf32>
    %64 = arith.addf %58, %63 : vector<10x8xf32>
    %65 = vector.extract_strided_slice %29 {offsets = [0, 6], sizes = [10, 1], strides = [1, 1]} : vector<10x10xf32> to vector<10x1xf32>
    %66 = vector.extract_strided_slice %28 {offsets = [6, 0], sizes = [1, 8], strides = [1, 1]} : vector<10x8xf32> to vector<1x8xf32>
    %67 = vector.broadcast %65 : vector<10x1xf32> to vector<10x8xf32>
    %68 = vector.broadcast %66 : vector<1x8xf32> to vector<10x8xf32>
    %69 = arith.mulf %67, %68 : vector<10x8xf32>
    %70 = arith.addf %64, %69 : vector<10x8xf32>
    %71 = vector.extract_strided_slice %29 {offsets = [0, 7], sizes = [10, 1], strides = [1, 1]} : vector<10x10xf32> to vector<10x1xf32>
    %72 = vector.extract_strided_slice %28 {offsets = [7, 0], sizes = [1, 8], strides = [1, 1]} : vector<10x8xf32> to vector<1x8xf32>
    %73 = vector.broadcast %71 : vector<10x1xf32> to vector<10x8xf32>
    %74 = vector.broadcast %72 : vector<1x8xf32> to vector<10x8xf32>
    %75 = arith.mulf %73, %74 : vector<10x8xf32>
    %76 = arith.addf %70, %75 : vector<10x8xf32>
    %77 = vector.extract_strided_slice %29 {offsets = [0, 8], sizes = [10, 1], strides = [1, 1]} : vector<10x10xf32> to vector<10x1xf32>
    %78 = vector.extract_strided_slice %28 {offsets = [8, 0], sizes = [1, 8], strides = [1, 1]} : vector<10x8xf32> to vector<1x8xf32>
    %79 = vector.broadcast %77 : vector<10x1xf32> to vector<10x8xf32>
    %80 = vector.broadcast %78 : vector<1x8xf32> to vector<10x8xf32>
    %81 = arith.mulf %79, %80 : vector<10x8xf32>
    %82 = arith.addf %76, %81 : vector<10x8xf32>
    %83 = vector.extract_strided_slice %29 {offsets = [0, 9], sizes = [10, 1], strides = [1, 1]} : vector<10x10xf32> to vector<10x1xf32>
    %84 = vector.extract_strided_slice %28 {offsets = [9, 0], sizes = [1, 8], strides = [1, 1]} : vector<10x8xf32> to vector<1x8xf32>
    %85 = vector.broadcast %83 : vector<10x1xf32> to vector<10x8xf32>
    %86 = vector.broadcast %84 : vector<1x8xf32> to vector<10x8xf32>
    %87 = arith.mulf %85, %86 : vector<10x8xf32>
    %88 = arith.addf %82, %87 : vector<10x8xf32>
    %c0_7 = arith.constant 0 : index
    %c0_8 = arith.constant 0 : index
    %89 = vector.load %arg5[%c0_7, %c0_8] : memref<10x1xf32, #tpu.memory_space<vmem>>, vector<10x1xf32>
    %90 = vector.broadcast %89 : vector<10x1xf32> to vector<10x8xf32>
    %91 = arith.addf %88, %90 : vector<10x8xf32>
    %92 = math.tanh %91 : vector<10x8xf32>
    %c0_9 = arith.constant 0 : index
    %c0_10 = arith.constant 0 : index
    %93 = vector.load %arg6[%c0_9, %c0_10] : memref<8x10xf32, #tpu.memory_space<vmem>>, vector<8x10xf32>
    %94 = vector.extract_strided_slice %93 {offsets = [0, 0], sizes = [8, 1], strides = [1, 1]} : vector<8x10xf32> to vector<8x1xf32>
    %95 = vector.extract_strided_slice %92 {offsets = [0, 0], sizes = [1, 8], strides = [1, 1]} : vector<10x8xf32> to vector<1x8xf32>
    %96 = vector.broadcast %94 : vector<8x1xf32> to vector<8x8xf32>
    %97 = vector.broadcast %95 : vector<1x8xf32> to vector<8x8xf32>
    %98 = arith.mulf %96, %97 : vector<8x8xf32>
    %99 = vector.extract_strided_slice %93 {offsets = [0, 1], sizes = [8, 1], strides = [1, 1]} : vector<8x10xf32> to vector<8x1xf32>
    %100 = vector.extract_strided_slice %92 {offsets = [1, 0], sizes = [1, 8], strides = [1, 1]} : vector<10x8xf32> to vector<1x8xf32>
    %101 = vector.broadcast %99 : vector<8x1xf32> to vector<8x8xf32>
    %102 = vector.broadcast %100 : vector<1x8xf32> to vector<8x8xf32>
    %103 = arith.mulf %101, %102 : vector<8x8xf32>
    %104 = arith.addf %98, %103 : vector<8x8xf32>
    %105 = vector.extract_strided_slice %93 {offsets = [0, 2], sizes = [8, 1], strides = [1, 1]} : vector<8x10xf32> to vector<8x1xf32>
    %106 = vector.extract_strided_slice %92 {offsets = [2, 0], sizes = [1, 8], strides = [1, 1]} : vector<10x8xf32> to vector<1x8xf32>
    %107 = vector.broadcast %105 : vector<8x1xf32> to vector<8x8xf32>
    %108 = vector.broadcast %106 : vector<1x8xf32> to vector<8x8xf32>
    %109 = arith.mulf %107, %108 : vector<8x8xf32>
    %110 = arith.addf %104, %109 : vector<8x8xf32>
    %111 = vector.extract_strided_slice %93 {offsets = [0, 3], sizes = [8, 1], strides = [1, 1]} : vector<8x10xf32> to vector<8x1xf32>
    %112 = vector.extract_strided_slice %92 {offsets = [3, 0], sizes = [1, 8], strides = [1, 1]} : vector<10x8xf32> to vector<1x8xf32>
    %113 = vector.broadcast %111 : vector<8x1xf32> to vector<8x8xf32>
    %114 = vector.broadcast %112 : vector<1x8xf32> to vector<8x8xf32>
    %115 = arith.mulf %113, %114 : vector<8x8xf32>
    %116 = arith.addf %110, %115 : vector<8x8xf32>
    %117 = vector.extract_strided_slice %93 {offsets = [0, 4], sizes = [8, 1], strides = [1, 1]} : vector<8x10xf32> to vector<8x1xf32>
    %118 = vector.extract_strided_slice %92 {offsets = [4, 0], sizes = [1, 8], strides = [1, 1]} : vector<10x8xf32> to vector<1x8xf32>
    %119 = vector.broadcast %117 : vector<8x1xf32> to vector<8x8xf32>
    %120 = vector.broadcast %118 : vector<1x8xf32> to vector<8x8xf32>
    %121 = arith.mulf %119, %120 : vector<8x8xf32>
    %122 = arith.addf %116, %121 : vector<8x8xf32>
    %123 = vector.extract_strided_slice %93 {offsets = [0, 5], sizes = [8, 1], strides = [1, 1]} : vector<8x10xf32> to vector<8x1xf32>
    %124 = vector.extract_strided_slice %92 {offsets = [5, 0], sizes = [1, 8], strides = [1, 1]} : vector<10x8xf32> to vector<1x8xf32>
    %125 = vector.broadcast %123 : vector<8x1xf32> to vector<8x8xf32>
    %126 = vector.broadcast %124 : vector<1x8xf32> to vector<8x8xf32>
    %127 = arith.mulf %125, %126 : vector<8x8xf32>
    %128 = arith.addf %122, %127 : vector<8x8xf32>
    %129 = vector.extract_strided_slice %93 {offsets = [0, 6], sizes = [8, 1], strides = [1, 1]} : vector<8x10xf32> to vector<8x1xf32>
    %130 = vector.extract_strided_slice %92 {offsets = [6, 0], sizes = [1, 8], strides = [1, 1]} : vector<10x8xf32> to vector<1x8xf32>
    %131 = vector.broadcast %129 : vector<8x1xf32> to vector<8x8xf32>
    %132 = vector.broadcast %130 : vector<1x8xf32> to vector<8x8xf32>
    %133 = arith.mulf %131, %132 : vector<8x8xf32>
    %134 = arith.addf %128, %133 : vector<8x8xf32>
    %135 = vector.extract_strided_slice %93 {offsets = [0, 7], sizes = [8, 1], strides = [1, 1]} : vector<8x10xf32> to vector<8x1xf32>
    %136 = vector.extract_strided_slice %92 {offsets = [7, 0], sizes = [1, 8], strides = [1, 1]} : vector<10x8xf32> to vector<1x8xf32>
    %137 = vector.broadcast %135 : vector<8x1xf32> to vector<8x8xf32>
    %138 = vector.broadcast %136 : vector<1x8xf32> to vector<8x8xf32>
    %139 = arith.mulf %137, %138 : vector<8x8xf32>
    %140 = arith.addf %134, %139 : vector<8x8xf32>
    %141 = vector.extract_strided_slice %93 {offsets = [0, 8], sizes = [8, 1], strides = [1, 1]} : vector<8x10xf32> to vector<8x1xf32>
    %142 = vector.extract_strided_slice %92 {offsets = [8, 0], sizes = [1, 8], strides = [1, 1]} : vector<10x8xf32> to vector<1x8xf32>
    %143 = vector.broadcast %141 : vector<8x1xf32> to vector<8x8xf32>
    %144 = vector.broadcast %142 : vector<1x8xf32> to vector<8x8xf32>
    %145 = arith.mulf %143, %144 : vector<8x8xf32>
    %146 = arith.addf %140, %145 : vector<8x8xf32>
    %147 = vector.extract_strided_slice %93 {offsets = [0, 9], sizes = [8, 1], strides = [1, 1]} : vector<8x10xf32> to vector<8x1xf32>
    %148 = vector.extract_strided_slice %92 {offsets = [9, 0], sizes = [1, 8], strides = [1, 1]} : vector<10x8xf32> to vector<1x8xf32>
    %149 = vector.broadcast %147 : vector<8x1xf32> to vector<8x8xf32>
    %150 = vector.broadcast %148 : vector<1x8xf32> to vector<8x8xf32>
    %151 = arith.mulf %149, %150 : vector<8x8xf32>
    %152 = arith.addf %146, %151 : vector<8x8xf32>
    %c0_11 = arith.constant 0 : index
    %c0_12 = arith.constant 0 : index
    %153 = vector.load %arg7[%c0_11, %c0_12] : memref<8x1xf32, #tpu.memory_space<vmem>>, vector<8x1xf32>
    %154 = vector.broadcast %153 : vector<8x1xf32> to vector<8x8xf32>
    %155 = arith.addf %152, %154 : vector<8x8xf32>
    %cst = arith.constant dense<0xFF800000> : vector<8xf32>
    %156 = vector.multi_reduction <maximumf>, %155, %cst [0] : vector<8x8xf32> to vector<8xf32>
    %157 = vector.shape_cast %156 : vector<8xf32> to vector<1x8xf32>
    %158 = vector.broadcast %157 : vector<1x8xf32> to vector<8x8xf32>
    %159 = arith.subf %155, %158 : vector<8x8xf32>
    %160 = math.exp %159 : vector<8x8xf32>
    %cst_13 = arith.constant dense<0.000000e+00> : vector<8xf32>
    %161 = vector.multi_reduction <add>, %160, %cst_13 [0] : vector<8x8xf32> to vector<8xf32>
    %162 = vector.shape_cast %161 : vector<8xf32> to vector<1x8xf32>
    %163 = math.log %162 : vector<1x8xf32>
    %164 = vector.broadcast %163 : vector<1x8xf32> to vector<8x8xf32>
    %165 = arith.subf %159, %164 : vector<8x8xf32>
    %c0_14 = arith.constant 0 : index
    %c0_15 = arith.constant 0 : index
    %166 = vector.load %arg8[%c0_14, %c0_15] : memref<8x8xf32, #tpu.memory_space<vmem>>, vector<8x8xf32>
    tpu.vector_store %arg8[%c0_14, %c0_15], %165 {strides = array<i32>} : memref<8x8xf32, #tpu.memory_space<vmem>>, vector<8x8xf32>,
    return
  }
  func.func @transform_0(%arg0: i32) -> (i32, i32) {
    %c0_i32 = arith.constant 0 : i32
    %c0_i32_0 = arith.constant 0 : i32
    return %c0_i32, %arg0 : i32, i32
  }
  func.func @transform_1(%arg0: i32) -> (i32, i32) {
    %c0_i32 = arith.constant 0 : i32
    %c0_i32_0 = arith.constant 0 : i32
    %c0_i32_1 = arith.constant 0 : i32
    return %c0_i32, %c0_i32_0 : i32, i32
  }
  func.func @transform_2(%arg0: i32) -> (i32, i32) {
    %c0_i32 = arith.constant 0 : i32
    %c0_i32_0 = arith.constant 0 : i32
    %c0_i32_1 = arith.constant 0 : i32
    return %c0_i32, %c0_i32_0 : i32, i32
  }
  func.func @transform_3(%arg0: i32) -> (i32, i32) {
    %c0_i32 = arith.constant 0 : i32
    %c0_i32_0 = arith.constant 0 : i32
    %c0_i32_1 = arith.constant 0 : i32
    return %c0_i32, %c0_i32_0 : i32, i32
  }
  func.func @transform_4(%arg0: i32) -> (i32, i32) {
    %c0_i32 = arith.constant 0 : i32
    %c0_i32_0 = arith.constant 0 : i32
    %c0_i32_1 = arith.constant 0 : i32
    return %c0_i32, %c0_i32_0 : i32, i32
  }
  func.func @transform_5(%arg0: i32) -> (i32, i32) {
    %c0_i32 = arith.constant 0 : i32
    %c0_i32_0 = arith.constant 0 : i32
    %c0_i32_1 = arith.constant 0 : i32
    return %c0_i32, %c0_i32_0 : i32, i32
  }
  func.func @transform_6(%arg0: i32) -> (i32, i32) {
    %c0_i32 = arith.constant 0 : i32
    %c0_i32_0 = arith.constant 0 : i32
    %c0_i32_1 = arith.constant 0 : i32
    return %c0_i32, %c0_i32_0 : i32, i32
  }
  func.func @transform_7(%arg0: i32) -> (i32, i32) {
    %c0_i32 = arith.constant 0 : i32
    %c0_i32_0 = arith.constant 0 : i32
    return %c0_i32, %arg0 : i32, i32
  }
}

</mosaic_0001>

<llo_original>
// kernel: net_forward_pallas.1
$region0: #{net_forward_pallas.1}
  #allocation0 [shape = 'u32[]', space=smem, size = 0x4, offset = 0x4, fixed_abs, tag = 'smem constant byte address 0x4 - core index']
  #allocation1 [shape = 'u32[144,128]{1,0:T(1,128)}', space=vmem, size = 0x12000, scoped, tag = 'internal scratch']
  %s0 = inlined_call_operand.vmem [shape: f32[4,8], index: 0, kind: input, shape index: {}]
  %s1 = inlined_call_operand.vmem [shape: f32[10,4], index: 1, kind: input, shape index: {}]
  %s2 = inlined_call_operand.vmem [shape: f32[10,1], index: 2, kind: input, shape index: {}]
  %s3 = inlined_call_operand.vmem [shape: f32[10,10], index: 3, kind: input, shape index: {}]
  %s4 = inlined_call_operand.vmem [shape: f32[10,1], index: 4, kind: input, shape index: {}]
  %s5 = inlined_call_operand.vmem [shape: f32[8,10], index: 5, kind: input, shape index: {}]
  %s6 = inlined_call_operand.vmem [shape: f32[8,1], index: 6, kind: input, shape index: {}]
  %s7 = inlined_call_operand.hbm [shape: f32[8,8], index: 7, kind: output, shape index: {}]
  %s8 = sld [smem:[#allocation0]]
  $region38: #{net_forward_pallas.1} parent=0
    _
  %s10 = ssub.s32 1, %s8
  %s11 = scalar_select 0, %s10, %s8
  $region1: #{net_forward_pallas.1} parent=0
    #allocation2 [shape = 'u8[4096]{0}', space=vmem, size = 0x1000, scoped, tag = 'output window, operand 0, single buffered']
    #allocation3 [shape = 's32[1]{0}', space=sflag, size = 0x4, scoped, tag = 'scoped memory for net_forward_pallas.1']
    %12 = vsyncpa [#allocation3], 0
    // Predicated region
    $region2: #{net_forward_pallas.1} parent=1 // pred_check
      _
    $region3: #{net_forward_pallas.1} parent=1 // pred_check_branch
      %14 = sbr.rel (0) target = $region5
    $region4: #{net_forward_pallas.1} parent=1 // pred_region
      _
    $region5: #{net_forward_pallas.1} parent=1 // pred_fallthru
      _
    // Predicated region
    $region6: #{net_forward_pallas.1} parent=1 // pred_check
      _
    $region7: #{net_forward_pallas.1} parent=1 // pred_check_branch
      %16 = sbr.rel (0) target = $region9
    $region8: #{net_forward_pallas.1} parent=1 // pred_region
      _
    $region9: #{net_forward_pallas.1} parent=1 // pred_fallthru
      _
    // Predicated region
    $region10: #{net_forward_pallas.1} parent=1 // pred_check
      _
    $region11: #{net_forward_pallas.1} parent=1 // pred_check_branch
      %18 = sbr.rel (0) target = $region13
    $region12: #{net_forward_pallas.1} parent=1 // pred_region
      _
    $region13: #{net_forward_pallas.1} parent=1 // pred_fallthru
      _
    // Predicated region
    $region14: #{net_forward_pallas.1} parent=1 // pred_check
      _
    $region15: #{net_forward_pallas.1} parent=1 // pred_check_branch
      %20 = sbr.rel (0) target = $region17
    $region16: #{net_forward_pallas.1} parent=1 // pred_region
      _
    $region17: #{net_forward_pallas.1} parent=1 // pred_fallthru
      _
    // Predicated region
    $region18: #{net_forward_pallas.1} parent=1 // pred_check
      _
    $region19: #{net_forward_pallas.1} parent=1 // pred_check_branch
      %22 = sbr.rel (0) target = $region21
    $region20: #{net_forward_pallas.1} parent=1 // pred_region
      _
    $region21: #{net_forward_pallas.1} parent=1 // pred_fallthru
      _
    // Predicated region
    $region22: #{net_forward_pallas.1} parent=1 // pred_check
      _
    $region23: #{net_forward_pallas.1} parent=1 // pred_check_branch
      %24 = sbr.rel (0) target = $region25
    $region24: #{net_forward_pallas.1} parent=1 // pred_region
      _
    $region25: #{net_forward_pallas.1} parent=1 // pred_fallthru
      _
    // Predicated region
    $region26: #{net_forward_pallas.1} parent=1 // pred_check
      _
    $region27: #{net_forward_pallas.1} parent=1 // pred_check_branch
      %26 = sbr.rel (0) target = $region29
    $region28: #{net_forward_pallas.1} parent=1 // pred_region
      _
    $region29: #{net_forward_pallas.1} parent=1 // pred_fallthru
      _
    %v27 = vld [vmem:[%s0] sm:$0xf]
    %v28 = vld [vmem:[%s1] sm:$0xff]
    %v29 = vld [vmem:[%s1 + $0x8] sm:$0x3]
    %31 = vset.pattern.permute.xlu0 0
    %32 = vperm.xlu0 %31, %v28
    %v33 = vpop.permute.xlu0 %32
    %36 = vset.pattern.permute.xlu0 0
    %37 = vperm.xlu0 %36, %v29
    %v38 = vpop.permute.xlu0 %37
    %v40 = vlaneseq
    %v41 = vshrl.u32 %v40, 7
    %v42 = vsub.s32 0, %v41
    %v43 = vrot.slane %v27, %v42
    %v44 = vmul.f32 %v33, %v43
    %v45 = vmul.f32 %v38, %v43
    %46 = vset.pattern.permute.xlu0 1
    %47 = vperm.xlu0 %46, %v28
    %v48 = vpop.permute.xlu0 %47
    %50 = vset.pattern.permute.xlu0 1
    %51 = vperm.xlu0 %50, %v29
    %v52 = vpop.permute.xlu0 %51
    %v54 = vlaneseq
    %v55 = vshrl.u32 %v54, 7
    %v56 = vsub.s32 1, %v55
    %v57 = vrot.slane %v27, %v56
    %v58 = vmul.f32 %v48, %v57
    %v59 = vmul.f32 %v52, %v57
    %v60 = vadd.f32 %v44, %v58
    %v61 = vadd.f32 %v45, %v59
    %62 = vset.pattern.permute.xlu0 2
    %63 = vperm.xlu0 %62, %v28
    %v64 = vpop.permute.xlu0 %63
    %66 = vset.pattern.permute.xlu0 2
    %67 = vperm.xlu0 %66, %v29
    %v68 = vpop.permute.xlu0 %67
    %v70 = vlaneseq
    %v71 = vshrl.u32 %v70, 7
    %v72 = vsub.s32 2, %v71
    %v73 = vrot.slane %v27, %v72
    %v74 = vmul.f32 %v64, %v73
    %v75 = vmul.f32 %v68, %v73
    %v76 = vadd.f32 %v60, %v74
    %v77 = vadd.f32 %v61, %v75
    %78 = vset.pattern.permute.xlu0 3
    %79 = vperm.xlu0 %78, %v28
    %v80 = vpop.permute.xlu0 %79
    %82 = vset.pattern.permute.xlu0 3
    %83 = vperm.xlu0 %82, %v29
    %v84 = vpop.permute.xlu0 %83
    %v86 = vlaneseq
    %v87 = vshrl.u32 %v86, 7
    %v88 = vsub.s32 3, %v87
    %v89 = vrot.slane %v27, %v88
    %v90 = vmul.f32 %v80, %v89
    %v91 = vmul.f32 %v84, %v89
    %v92 = vadd.f32 %v76, %v90
    %v93 = vadd.f32 %v77, %v91
    %v94 = vld [vmem:[%s2] sm:$0xff]
    %v95 = vld [vmem:[%s2 + $0x8] sm:$0x3]
    %97 = vset.pattern.permute.xlu0 0
    %98 = vperm.xlu0 %97, %v94
    %v99 = vpop.permute.xlu0 %98
    %102 = vset.pattern.permute.xlu0 0
    %103 = vperm.xlu0 %102, %v95
    %v104 = vpop.permute.xlu0 %103
    %v106 = vadd.f32 %v92, %v99
    %v107 = vadd.f32 %v93, %v104
    %v108 = vtanh.pop %v106
    %v109 = vtanh.pop %v107
    %v110 = vld [vmem:[%s3] sm:$0xff]
    %v111 = vld [vmem:[%s3 + $0x8] sm:$0x3]
    %113 = vset.pattern.permute.xlu0 0
    %114 = vperm.xlu0 %113, %v110
    %v115 = vpop.permute.xlu0 %114
    %118 = vset.pattern.permute.xlu0 0
    %119 = vperm.xlu0 %118, %v111
    %v120 = vpop.permute.xlu0 %119
    %v122 = vlaneseq
    %v123 = vshrl.u32 %v122, 7
    %v124 = vsub.s32 0, %v123
    %v125 = vrot.slane %v108, %v124
    %v126 = vmul.f32 %v115, %v125
    %v127 = vmul.f32 %v120, %v125
    %128 = vset.pattern.permute.xlu0 1
    %129 = vperm.xlu0 %128, %v110
    %v130 = vpop.permute.xlu0 %129
    %132 = vset.pattern.permute.xlu0 1
    %133 = vperm.xlu0 %132, %v111
    %v134 = vpop.permute.xlu0 %133
    %v136 = vlaneseq
    %v137 = vshrl.u32 %v136, 7
    %v138 = vsub.s32 1, %v137
    %v139 = vrot.slane %v108, %v138
    %v140 = vmul.f32 %v130, %v139
    %v141 = vmul.f32 %v134, %v139
    %v142 = vadd.f32 %v126, %v140
    %v143 = vadd.f32 %v127, %v141
    %144 = vset.pattern.permute.xlu0 2
    %145 = vperm.xlu0 %144, %v110
    %v146 = vpop.permute.xlu0 %145
    %148 = vset.pattern.permute.xlu0 2
    %149 = vperm.xlu0 %148, %v111
    %v150 = vpop.permute.xlu0 %149
    %v152 = vlaneseq
    %v153 = vshrl.u32 %v152, 7
    %v154 = vsub.s32 2, %v153
    %v155 = vrot.slane %v108, %v154
    %v156 = vmul.f32 %v146, %v155
    %v157 = vmul.f32 %v150, %v155
    %v158 = vadd.f32 %v142, %v156
    %v159 = vadd.f32 %v143, %v157
    %160 = vset.pattern.permute.xlu0 3
    %161 = vperm.xlu0 %160, %v110
    %v162 = vpop.permute.xlu0 %161
    %164 = vset.pattern.permute.xlu0 3
    %165 = vperm.xlu0 %164, %v111
    %v166 = vpop.permute.xlu0 %165
    %v168 = vlaneseq
    %v169 = vshrl.u32 %v168, 7
    %v170 = vsub.s32 3, %v169
    %v171 = vrot.slane %v108, %v170
    %v172 = vmul.f32 %v162, %v171
    %v173 = vmul.f32 %v166, %v171
    %v174 = vadd.f32 %v158, %v172
    %v175 = vadd.f32 %v159, %v173
    %176 = vset.pattern.permute.xlu0 4
    %177 = vperm.xlu0 %176, %v110
    %v178 = vpop.permute.xlu0 %177
    %180 = vset.pattern.permute.xlu0 4
    %181 = vperm.xlu0 %180, %v111
    %v182 = vpop.permute.xlu0 %181
    %v184 = vlaneseq
    %v185 = vshrl.u32 %v184, 7
    %v186 = vsub.s32 4, %v185
    %v187 = vrot.slane %v108, %v186
    %v188 = vmul.f32 %v178, %v187
    %v189 = vmul.f32 %v182, %v187
    %v190 = vadd.f32 %v174, %v188
    %v191 = vadd.f32 %v175, %v189
    %192 = vset.pattern.permute.xlu0 5
    %193 = vperm.xlu0 %192, %v110
    %v194 = vpop.permute.xlu0 %193
    %196 = vset.pattern.permute.xlu0 5
    %197 = vperm.xlu0 %196, %v111
    %v198 = vpop.permute.xlu0 %197
    %v200 = vlaneseq
    %v201 = vshrl.u32 %v200, 7
    %v202 = vsub.s32 5, %v201
    %v203 = vrot.slane %v108, %v202
    %v204 = vmul.f32 %v194, %v203
    %v205 = vmul.f32 %v198, %v203
    %v206 = vadd.f32 %v190, %v204
    %v207 = vadd.f32 %v191, %v205
    %208 = vset.pattern.permute.xlu0 6
    %209 = vperm.xlu0 %208, %v110
    %v210 = vpop.permute.xlu0 %209
    %212 = vset.pattern.permute.xlu0 6
    %213 = vperm.xlu0 %212, %v111
    %v214 = vpop.permute.xlu0 %213
    %v216 = vlaneseq
    %v217 = vshrl.u32 %v216, 7
    %v218 = vsub.s32 6, %v217
    %v219 = vrot.slane %v108, %v218
    %v220 = vmul.f32 %v210, %v219
    %v221 = vmul.f32 %v214, %v219
    %v222 = vadd.f32 %v206, %v220
    %v223 = vadd.f32 %v207, %v221
    %224 = vset.pattern.permute.xlu0 7
    %225 = vperm.xlu0 %224, %v110
    %v226 = vpop.permute.xlu0 %225
    %228 = vset.pattern.permute.xlu0 7
    %229 = vperm.xlu0 %228, %v111
    %v230 = vpop.permute.xlu0 %229
    %v232 = vlaneseq
    %v233 = vshrl.u32 %v232, 7
    %v234 = vsub.s32 7, %v233
    %v235 = vrot.slane %v108, %v234
    %v236 = vmul.f32 %v226, %v235
    %v237 = vmul.f32 %v230, %v235
    %v238 = vadd.f32 %v222, %v236
    %v239 = vadd.f32 %v223, %v237
    %240 = vset.pattern.permute.xlu0 8
    %241 = vperm.xlu0 %240, %v110
    %v242 = vpop.permute.xlu0 %241
    %244 = vset.pattern.permute.xlu0 8
    %245 = vperm.xlu0 %244, %v111
    %v246 = vpop.permute.xlu0 %245
    %v248 = vlaneseq
    %v249 = vshrl.u32 %v248, 7
    %v250 = vsub.s32 0, %v249
    %v251 = vrot.slane %v109, %v250
    %v252 = vmul.f32 %v242, %v251
    %v253 = vmul.f32 %v246, %v251
    %v254 = vadd.f32 %v238, %v252
    %v255 = vadd.f32 %v239, %v253
    %256 = vset.pattern.permute.xlu0 9
    %257 = vperm.xlu0 %256, %v110
    %v258 = vpop.permute.xlu0 %257
    %260 = vset.pattern.permute.xlu0 9
    %261 = vperm.xlu0 %260, %v111
    %v262 = vpop.permute.xlu0 %261
    %v264 = vlaneseq
    %v265 = vshrl.u32 %v264, 7
    %v266 = vsub.s32 1, %v265
    %v267 = vrot.slane %v109, %v266
    %v268 = vmul.f32 %v258, %v267
    %v269 = vmul.f32 %v262, %v267
    %v270 = vadd.f32 %v254, %v268
    %v271 = vadd.f32 %v255, %v269
    %v272 = vld [vmem:[%s4] sm:$0xff]
    %v273 = vld [vmem:[%s4 + $0x8] sm:$0x3]
    %275 = vset.pattern.permute.xlu0 0
    %276 = vperm.xlu0 %275, %v272
    %v277 = vpop.permute.xlu0 %276
    %280 = vset.pattern.permute.xlu0 0
    %281 = vperm.xlu0 %280, %v273
    %v282 = vpop.permute.xlu0 %281
    %v284 = vadd.f32 %v270, %v277
    %v285 = vadd.f32 %v271, %v282
    %v286 = vtanh.pop %v284
    %v287 = vtanh.pop %v285
    %v288 = vld [vmem:[%s5] sm:$0xff]
    %290 = vset.pattern.permute.xlu0 0
    %291 = vperm.xlu0 %290, %v288
    %v292 = vpop.permute.xlu0 %291
    %v294 = vlaneseq
    %v295 = vshrl.u32 %v294, 7
    %v296 = vsub.s32 0, %v295
    %v297 = vrot.slane %v286, %v296
    %v298 = vmul.f32 %v292, %v297
    %299 = vset.pattern.permute.xlu0 1
    %300 = vperm.xlu0 %299, %v288
    %v301 = vpop.permute.xlu0 %300
    %v303 = vlaneseq
    %v304 = vshrl.u32 %v303, 7
    %v305 = vsub.s32 1, %v304
    %v306 = vrot.slane %v286, %v305
    %v307 = vmul.f32 %v301, %v306
    %v308 = vadd.f32 %v298, %v307
    %309 = vset.pattern.permute.xlu0 2
    %310 = vperm.xlu0 %309, %v288
    %v311 = vpop.permute.xlu0 %310
    %v313 = vlaneseq
    %v314 = vshrl.u32 %v313, 7
    %v315 = vsub.s32 2, %v314
    %v316 = vrot.slane %v286, %v315
    %v317 = vmul.f32 %v311, %v316
    %v318 = vadd.f32 %v308, %v317
    %319 = vset.pattern.permute.xlu0 3
    %320 = vperm.xlu0 %319, %v288
    %v321 = vpop.permute.xlu0 %320
    %v323 = vlaneseq
    %v324 = vshrl.u32 %v323, 7
    %v325 = vsub.s32 3, %v324
    %v326 = vrot.slane %v286, %v325
    %v327 = vmul.f32 %v321, %v326
    %v328 = vadd.f32 %v318, %v327
    %329 = vset.pattern.permute.xlu0 4
    %330 = vperm.xlu0 %329, %v288
    %v331 = vpop.permute.xlu0 %330
    %v333 = vlaneseq
    %v334 = vshrl.u32 %v333, 7
    %v335 = vsub.s32 4, %v334
    %v336 = vrot.slane %v286, %v335
    %v337 = vmul.f32 %v331, %v336
    %v338 = vadd.f32 %v328, %v337
    %339 = vset.pattern.permute.xlu0 5
    %340 = vperm.xlu0 %339, %v288
    %v341 = vpop.permute.xlu0 %340
    %v343 = vlaneseq
    %v344 = vshrl.u32 %v343, 7
    %v345 = vsub.s32 5, %v344
    %v346 = vrot.slane %v286, %v345
    %v347 = vmul.f32 %v341, %v346
    %v348 = vadd.f32 %v338, %v347
    %349 = vset.pattern.permute.xlu0 6
    %350 = vperm.xlu0 %349, %v288
    %v351 = vpop.permute.xlu0 %350
    %v353 = vlaneseq
    %v354 = vshrl.u32 %v353, 7
    %v355 = vsub.s32 6, %v354
    %v356 = vrot.slane %v286, %v355
    %v357 = vmul.f32 %v351, %v356
    %v358 = vadd.f32 %v348, %v357
    %359 = vset.pattern.permute.xlu0 7
    %360 = vperm.xlu0 %359, %v288
    %v361 = vpop.permute.xlu0 %360
    %v363 = vlaneseq
    %v364 = vshrl.u32 %v363, 7
    %v365 = vsub.s32 7, %v364
    %v366 = vrot.slane %v286, %v365
    %v367 = vmul.f32 %v361, %v366
    %v368 = vadd.f32 %v358, %v367
    %369 = vset.pattern.permute.xlu0 8
    %370 = vperm.xlu0 %369, %v288
    %v371 = vpop.permute.xlu0 %370
    %v373 = vlaneseq
    %v374 = vshrl.u32 %v373, 7
    %v375 = vsub.s32 0, %v374
    %v376 = vrot.slane %v287, %v375
    %v377 = vmul.f32 %v371, %v376
    %v378 = vadd.f32 %v368, %v377
    %379 = vset.pattern.permute.xlu0 9
    %380 = vperm.xlu0 %379, %v288
    %v381 = vpop.permute.xlu0 %380
    %v383 = vlaneseq
    %v384 = vshrl.u32 %v383, 7
    %v385 = vsub.s32 1, %v384
    %v386 = vrot.slane %v287, %v385
    %v387 = vmul.f32 %v381, %v386
    %v388 = vadd.f32 %v378, %v387
    %v389 = vld [vmem:[%s6] sm:$0xff]
    %391 = vset.pattern.permute.xlu0 0
    %392 = vperm.xlu0 %391, %v389
    %v393 = vpop.permute.xlu0 %392
    %v395 = vadd.f32 %v388, %v393
    %vm396 = vcmask 64512
    %v397 = vsel %vm396, %v395, -inf
    %v398 = vrot.slane %v397, 4
    %v399 = vmax.f32 %v397, %v398
    %v400 = vrot.slane %v399, 2
    %v401 = vmax.f32 %v399, %v400
    %v402 = vrot.slane %v401, 1
    %v403 = vmax.f32 %v401, %v402
    %v404 = vsub.f32 %v395, %v403
    %v405 = vmul.f32 %v404, 1.442695
    %v406 = vpow.pop %v405
    %v407 = vsel %vm396, %v406, 0.0
    %v408 = vrot.slane %v407, 4
    %v409 = vadd.f32 %v407, %v408
    %v410 = vrot.slane %v409, 2
    %v411 = vadd.f32 %v409, %v410
    %v412 = vrot.slane %v411, 1
    %v413 = vadd.f32 %v411, %v412
    %v414 = vlog2.pop %v413
    %v415 = vmul.f32 %v414, 0.6931472
    %v416 = vsub.f32 %v404, %v415
    %417 = vst.msk [vmem:[#allocation2] sm:$0xff] %vm396, %v416
    // Predicated region
    $region30: #{net_forward_pallas.1} parent=1 // pred_check
      _
    $region31: #{net_forward_pallas.1} parent=1 // pred_check_branch
      %419 = sbr.rel (0) target = $region33
    $region32: #{net_forward_pallas.1} parent=1 // pred_region
      %s421 = ssub.s32 128, 128
      %422 = vsyncadd [#allocation3], %s421
      %s424 = sshll.u32 [#allocation2], 4
      %s425 = int_to_ptr.vmem [resolvable:$true] %s424
      %427 = dma.vmem_to_hbm [thread:$0]  %s425, 128, %s7, [#allocation3]
    $region33: #{net_forward_pallas.1} parent=1 // pred_fallthru
      _
    // Predicated region
    $region34: #{net_forward_pallas.1} parent=1 // pred_check
      _
    $region35: #{net_forward_pallas.1} parent=1 // pred_check_branch
      %429 = sbr.rel (0) target = $region37
    $region36: #{net_forward_pallas.1} parent=1 // pred_region
      %430 = dma.done [#allocation3], 128
    $region37: #{net_forward_pallas.1} parent=1 // pred_fallthru
      _
    %431 = vsyncpa [#allocation3], 1

</llo_original>
